<compile_context>
chip_gen: v7x
topology: tpu7x:2x2x1
jax: 0.10.0
libtpu: 0.0.40
codegen_flags: <defaults>
</compile_context>

<pallas_src>
import jax
import jax.numpy as jnp
import numpy as np
from jax.experimental import pallas as pl
from jax.experimental.pallas import tpu as pltpu  # noqa: F401  (TPU backend)

_LANE = 128


def _round_up(n, m):
    return ((n + m - 1) // m) * m


def _mlp_kernel(x_ref, w1_ref, w2_ref, o_ref):
    # fc1 (+ folded b1) on lane-dense padded tiles, f32 accumulation on MXU.
    h = jnp.dot(x_ref[...], w1_ref[...], preferred_element_type=jnp.float32)
    h = jnp.maximum(h, 0.0)
    # The last hidden column is 1 (planted via w1_pad, survives ReLU) and
    # carries b2 through this matmul, so no bias add / broadcast is needed.
    o = jnp.dot(h, w2_ref[...], preferred_element_type=jnp.float32)
    o_ref[...] = o.astype(o_ref.dtype)


def pack_params(w1, b1, w2, b2):
    """Pad weights to lane-aligned shapes and fold biases into the matmuls.

    w1: (in, hid), b1: (hid,) or (1, hid); w2: (hid, out), b2: (out,) or (1, out).
    Weights are stored pre-transposed as (in_features, out_features) relative
    to PyTorch, so the kernel computes x @ W.

    Returns (w1_pad, w2_pad):
      w1_pad: (in_pad, hid_pad)  -- row in_pad-1 is [b1, 0..., 1]
      w2_pad: (hid_pad, out_pad) -- row hid_pad-1 is [b2, 0...]
    """
    in_dim, hid = w1.shape
    out_dim = w2.shape[1]
    b1 = jnp.reshape(b1, (hid,))
    b2 = jnp.reshape(b2, (out_dim,))

    in_pad = _round_up(in_dim + 1, _LANE)   # +1: ones column of x (bias carrier)
    hid_pad = _round_up(hid + 1, _LANE)     # +1: ones column of h (bias carrier)
    out_pad = _round_up(out_dim, _LANE)

    w1_pad = jnp.zeros((in_pad, hid_pad), w1.dtype)
    w1_pad = w1_pad.at[:in_dim, :hid].set(w1)
    w1_pad = w1_pad.at[in_pad - 1, :hid].set(b1)                # fold b1
    w1_pad = w1_pad.at[in_pad - 1, hid_pad - 1].set(
        jnp.asarray(1.0, w1.dtype))                             # plant ones col in h

    w2_pad = jnp.zeros((hid_pad, out_pad), w2.dtype)
    w2_pad = w2_pad.at[:hid, :out_dim].set(w2)
    w2_pad = w2_pad.at[hid_pad - 1, :out_dim].set(b2)           # fold b2
    return w1_pad, w2_pad


def expand_dim_net(x, w1_pad, w2_pad, out_dim):
    """x: (B, input_dim) f32; packed weights from pack_params. Returns (B, out_dim)."""
    B, in_dim = x.shape
    in_pad = w1_pad.shape[0]
    out_pad = w2_pad.shape[1]

    # Pad x to lane-aligned width; trailing column of ones carries b1.
    x_pad = jnp.zeros((B, in_pad), x.dtype)
    x_pad = x_pad.at[:, :in_dim].set(x)
    x_pad = x_pad.at[:, in_pad - 1].set(jnp.asarray(1.0, x.dtype))

    # Single-shot kernel (grid=()): every array is one full-extent VMEM block.
    full = lambda shape: pl.BlockSpec(shape, lambda: (0,) * len(shape))

    o_pad = pl.pallas_call(
        _mlp_kernel,
        out_shape=jax.ShapeDtypeStruct((B, out_pad), x.dtype),
        in_specs=[
            full((B, in_pad)),
            full(tuple(w1_pad.shape)),
            full(tuple(w2_pad.shape)),
        ],
        out_specs=full((B, out_pad)),
    )(x_pad, w1_pad, w2_pad)

    # Kernel stores a lane-dense (256-wide) slab; slice back in plain JAX.
    return o_pad[:, :out_dim]


def _init_linear(key, in_features, out_features, dtype=jnp.float32):
    # Mimic torch.nn.Linear default init: U(-1/sqrt(fan_in), 1/sqrt(fan_in)).
    kw, kb = jax.random.split(key)
    bound = 1.0 / np.sqrt(in_features)
    # Stored as (in_features, out_features) = W^T relative to PyTorch.
    w = jax.random.uniform(kw, (in_features, out_features), dtype,
                           minval=-bound, maxval=bound)
    b = jax.random.uniform(kb, (1, out_features), dtype,
                           minval=-bound, maxval=bound)
    return w, b


if __name__ == "__main__":
    input_dim, hidden_dim, output_dim = 120, 180, 240
    batch = 8

    key = jax.random.PRNGKey(0)
    kx, k1, k2 = jax.random.split(key, 3)

    x = jax.random.normal(kx, (batch, input_dim), jnp.float32)
    w1, b1 = _init_linear(k1, input_dim, hidden_dim)
    w2, b2 = _init_linear(k2, hidden_dim, output_dim)

    # One-time weight prep: pad + fold biases.
    w1_pad, w2_pad = pack_params(w1, b1, w2, b2)

    out = expand_dim_net(x, w1_pad, w2_pad, output_dim)
    out = jax.block_until_ready(out)

    # Reference check in plain JAX (unpadded math).
    ref = jnp.maximum(x @ w1 + b1, 0.0) @ w2 + b2
    np.testing.assert_allclose(np.asarray(out), np.asarray(ref),
                               rtol=1e-5, atol=1e-5)

    print("KERNEL_OK")
</pallas_src>

<mosaic_0001>
module attributes {stable_mosaic.version = 11 : i64} {
  func.func @_mlp_kernel(%arg0: memref<8x128xf32, #tpu.memory_space<vmem>>, %arg1: memref<128x256xf32, #tpu.memory_space<vmem>>, %arg2: memref<256x256xf32, #tpu.memory_space<vmem>>, %arg3: memref<8x256xf32, #tpu.memory_space<vmem>>) attributes {dimension_semantics = [], scalar_prefetch = 0 : i64, scratch_operands = 0 : i64, tpu.core_type = #tpu.core_type<tc>} {
    %c0 = arith.constant 0 : index
    %c0_0 = arith.constant 0 : index
    %0 = vector.load %arg0[%c0, %c0_0] : memref<8x128xf32, #tpu.memory_space<vmem>>, vector<8x128xf32>
    %c0_1 = arith.constant 0 : index
    %c0_2 = arith.constant 0 : index
    %1 = vector.load %arg1[%c0_1, %c0_2] : memref<128x256xf32, #tpu.memory_space<vmem>>, vector<128x256xf32>
    %cst = arith.constant dense<0.000000e+00> : vector<8x256xf32>
    %2 = tpu.matmul %0, %1, %cst {dimension_numbers = #tpu.dot_dimension_numbers<[1], [0], [0], [1], [0, 0, 1, 1], [], []>} : vector<8x128xf32>, vector<128x256xf32>, vector<8x256xf32> -> vector<8x256xf32>
    %cst_3 = arith.constant 0.000000e+00 : f32
    %3 = vector.broadcast %cst_3 : f32 to vector<8x256xf32>
    %4 = arith.maximumf %2, %3 : vector<8x256xf32>
    %c0_4 = arith.constant 0 : index
    %c0_5 = arith.constant 0 : index
    %5 = vector.load %arg2[%c0_4, %c0_5] : memref<256x256xf32, #tpu.memory_space<vmem>>, vector<256x256xf32>
    %cst_6 = arith.constant dense<0.000000e+00> : vector<8x256xf32>
    %6 = tpu.matmul %4, %5, %cst_6 {dimension_numbers = #tpu.dot_dimension_numbers<[1], [0], [0], [1], [0, 0, 1, 1], [], []>} : vector<8x256xf32>, vector<256x256xf32>, vector<8x256xf32> -> vector<8x256xf32>
    %c0_7 = arith.constant 0 : index
    %c0_8 = arith.constant 0 : index
    %7 = vector.load %arg3[%c0_7, %c0_8] : memref<8x256xf32, #tpu.memory_space<vmem>>, vector<8x256xf32>
    tpu.vector_store %arg3[%c0_7, %c0_8], %6 {strides = array<i32>} : memref<8x256xf32, #tpu.memory_space<vmem>>, vector<8x256xf32>,
    return
  }
}

</mosaic_0001>

<llo_original>
// kernel: tpu_custom_call.1
$region0: #{tpu_custom_call.1}
  #allocation0 [shape = 'u32[]', space=smem, size = 0x4, offset = 0x4, fixed_abs, tag = 'smem constant byte address 0x4 - core index']
  #allocation1 [shape = 'u32[144,128]{1,0:T(1,128)}', space=vmem, size = 0x12000, scoped, tag = 'internal scratch']
  %s0 = inlined_call_operand.hbm [shape: f32[8,128], index: 0, kind: input, shape index: {}]
  %s1 = inlined_call_operand.hbm [shape: f32[128,256], index: 1, kind: input, shape index: {}]
  %s2 = inlined_call_operand.hbm [shape: f32[256,256], index: 2, kind: input, shape index: {}]
  %s3 = inlined_call_operand.hbm [shape: f32[8,256], index: 3, kind: output, shape index: {}]
  %s4 = sld [smem:[#allocation0]]
  $region34: #{tpu_custom_call.1} parent=0
    _
  %s6 = ssub.s32 1, %s4
  %s7 = scalar_select 0, %s6, %s4
  $region1: #{tpu_custom_call.1} parent=0
    #allocation2 [shape = 'u8[4096]{0}', space=vmem, size = 0x1000, scoped, tag = 'input window, operand 0, single buffered']
    #allocation3 [shape = 's32[1]{0}', space=sflag, size = 0x4, scoped, tag = 'scoped memory for tpu_custom_call.1']
    #allocation4 [shape = 's32[1]{0}', space=sflag, size = 0x4, scoped, tag = 'scoped memory for tpu_custom_call.1']
    #allocation5 [shape = 'u8[131072]{0}', space=vmem, size = 0x20000, scoped, tag = 'input window, operand 1, single buffered']
    #allocation6 [shape = 's32[1]{0}', space=sflag, size = 0x4, scoped, tag = 'scoped memory for tpu_custom_call.1']
    #allocation7 [shape = 'u8[262144]{0}', space=vmem, size = 0x40000, scoped, tag = 'input window, operand 2, single buffered']
    #allocation8 [shape = 'u8[8192]{0}', space=vmem, size = 0x2000, scoped, tag = 'output window, operand 0, single buffered']
    %8 = vsyncpa [#allocation3], 0
    %9 = vsyncpa [#allocation6], 0
    %10 = vsyncpa [#allocation4], 0
    // Predicated region
    $region2: #{tpu_custom_call.1} parent=1 // pred_check
      _
    $region3: #{tpu_custom_call.1} parent=1 // pred_check_branch
      %12 = sbr.rel (0) target = $region5
    $region4: #{tpu_custom_call.1} parent=1 // pred_region
      %s14 = ssub.s32 128, 128
      %15 = vsyncadd [#allocation3], %s14
      %s17 = sshll.u32 [#allocation2], 4
      %s18 = int_to_ptr.vmem [resolvable:$true] %s17
      %20 = dma.hbm_to_vmem [thread:$0]  %s0, 128, %s18, [#allocation3]
    $region5: #{tpu_custom_call.1} parent=1 // pred_fallthru
      _
    // Predicated region
    $region6: #{tpu_custom_call.1} parent=1 // pred_check
      _
    $region7: #{tpu_custom_call.1} parent=1 // pred_check_branch
      %22 = sbr.rel (0) target = $region9
    $region8: #{tpu_custom_call.1} parent=1 // pred_region
      %s24 = ssub.s32 4096, 4096
      %25 = vsyncadd [#allocation6], %s24
      %s26 = sshll.u32 [#allocation5], 4
      %s27 = int_to_ptr.vmem [resolvable:$true] %s26
      %32 = dma.hbm_to_vmem [thread:$0]  %s1, 4096, %s27, [#allocation6], 256, 256, 16
    $region9: #{tpu_custom_call.1} parent=1 // pred_fallthru
      _
    // Predicated region
    $region10: #{tpu_custom_call.1} parent=1 // pred_check
      _
    $region11: #{tpu_custom_call.1} parent=1 // pred_check_branch
      %34 = sbr.rel (0) target = $region13
    $region12: #{tpu_custom_call.1} parent=1 // pred_region
      %s36 = ssub.s32 8192, 8192
      %37 = vsyncadd [#allocation6], %s36
      %s38 = sshll.u32 [#allocation7], 4
      %s39 = int_to_ptr.vmem [resolvable:$true] %s38
      %44 = dma.hbm_to_vmem [thread:$0]  %s2, 8192, %s39, [#allocation6], 256, 256, 16
    $region13: #{tpu_custom_call.1} parent=1 // pred_fallthru
      _
    // Predicated region
    $region14: #{tpu_custom_call.1} parent=1 // pred_check
      _
    $region15: #{tpu_custom_call.1} parent=1 // pred_check_branch
      %46 = sbr.rel (0) target = $region17
    $region16: #{tpu_custom_call.1} parent=1 // pred_region
      %47 = dma.done [#allocation3], 128
    $region17: #{tpu_custom_call.1} parent=1 // pred_fallthru
      _
    // Predicated region
    $region18: #{tpu_custom_call.1} parent=1 // pred_check
      _
    $region19: #{tpu_custom_call.1} parent=1 // pred_check_branch
      %49 = sbr.rel (0) target = $region21
    $region20: #{tpu_custom_call.1} parent=1 // pred_region
      %50 = dma.done [#allocation6], 4096
    $region21: #{tpu_custom_call.1} parent=1 // pred_fallthru
      _
    // Predicated region
    $region22: #{tpu_custom_call.1} parent=1 // pred_check
      _
    $region23: #{tpu_custom_call.1} parent=1 // pred_check_branch
      %52 = sbr.rel (0) target = $region25
    $region24: #{tpu_custom_call.1} parent=1 // pred_region
      %53 = dma.done [#allocation6], 8192
    $region25: #{tpu_custom_call.1} parent=1 // pred_fallthru
      _
    %v54 = vld [vmem:[#allocation2] sm:$0xff]
    %v55 = vld [vmem:[#allocation5] sm:$0xff]
    %v56 = vld [vmem:[#allocation5 + $0x8] sm:$0xff]
    %v57 = vld [vmem:[#allocation5 + $0x10] sm:$0xff]
    %v58 = vld [vmem:[#allocation5 + $0x18] sm:$0xff]
    %v59 = vld [vmem:[#allocation5 + $0x20] sm:$0xff]
    %v60 = vld [vmem:[#allocation5 + $0x28] sm:$0xff]
    %v61 = vld [vmem:[#allocation5 + $0x30] sm:$0xff]
    %v62 = vld [vmem:[#allocation5 + $0x38] sm:$0xff]
    %v63 = vld [vmem:[#allocation5 + $0x40] sm:$0xff]
    %v64 = vld [vmem:[#allocation5 + $0x48] sm:$0xff]
    %v65 = vld [vmem:[#allocation5 + $0x50] sm:$0xff]
    %v66 = vld [vmem:[#allocation5 + $0x58] sm:$0xff]
    %v67 = vld [vmem:[#allocation5 + $0x60] sm:$0xff]
    %v68 = vld [vmem:[#allocation5 + $0x68] sm:$0xff]
    %v69 = vld [vmem:[#allocation5 + $0x70] sm:$0xff]
    %v70 = vld [vmem:[#allocation5 + $0x78] sm:$0xff]
    %v71 = vld [vmem:[#allocation5 + $0x80] sm:$0xff]
    %v72 = vld [vmem:[#allocation5 + $0x88] sm:$0xff]
    %v73 = vld [vmem:[#allocation5 + $0x90] sm:$0xff]
    %v74 = vld [vmem:[#allocation5 + $0x98] sm:$0xff]
    %v75 = vld [vmem:[#allocation5 + $0xa0] sm:$0xff]
    %v76 = vld [vmem:[#allocation5 + $0xa8] sm:$0xff]
    %v77 = vld [vmem:[#allocation5 + $0xb0] sm:$0xff]
    %v78 = vld [vmem:[#allocation5 + $0xb8] sm:$0xff]
    %v79 = vld [vmem:[#allocation5 + $0xc0] sm:$0xff]
    %v80 = vld [vmem:[#allocation5 + $0xc8] sm:$0xff]
    %v81 = vld [vmem:[#allocation5 + $0xd0] sm:$0xff]
    %v82 = vld [vmem:[#allocation5 + $0xd8] sm:$0xff]
    %v83 = vld [vmem:[#allocation5 + $0xe0] sm:$0xff]
    %v84 = vld [vmem:[#allocation5 + $0xe8] sm:$0xff]
    %v85 = vld [vmem:[#allocation5 + $0xf0] sm:$0xff]
    %v86 = vld [vmem:[#allocation5 + $0xf8] sm:$0xff]
    %87 = vmatprep.subr.mxu0 %v56
    %88 = vmatpush1.msra.mxu0 %v55
    %89 = vmatprep.subr.mxu0 %v58
    %90 = vmatpush1.msra.mxu0 %v57
    %91 = vmatprep.subr.mxu0 %v60
    %92 = vmatpush1.msra.mxu0 %v59
    %93 = vmatprep.subr.mxu0 %v62
    %94 = vmatpush1.msra.mxu0 %v61
    %95 = vmatprep.subr.mxu0 %v64
    %96 = vmatpush1.msra.mxu0 %v63
    %97 = vmatprep.subr.mxu0 %v66
    %98 = vmatpush1.msra.mxu0 %v65
    %99 = vmatprep.subr.mxu0 %v68
    %100 = vmatpush1.msra.mxu0 %v67
    %101 = vmatprep.subr.mxu0 %v70
    %102 = vmatpush1.msra.mxu0 %v69
    %103 = vmatprep.subr.mxu0 %v72
    %104 = vmatpush1.msra.mxu0 %v71
    %105 = vmatprep.subr.mxu0 %v74
    %106 = vmatpush1.msra.mxu0 %v73
    %107 = vmatprep.subr.mxu0 %v76
    %108 = vmatpush1.msra.mxu0 %v75
    %109 = vmatprep.subr.mxu0 %v78
    %110 = vmatpush1.msra.mxu0 %v77
    %111 = vmatprep.subr.mxu0 %v80
    %112 = vmatpush1.msra.mxu0 %v79
    %113 = vmatprep.subr.mxu0 %v82
    %114 = vmatpush1.msra.mxu0 %v81
    %115 = vmatprep.subr.mxu0 %v84
    %116 = vmatpush1.msra.mxu0 %v83
    %117 = vmatprep.subr.mxu0 %v86
    %118 = vmatpush1.msra.mxu0 %v85
    %119 = vmatprep.subr.mxu0 0.0
    %120 = vmatpush1.msra.mxu0 0.0
    %121 = vmatprep.subr.mxu0 0.0
    %122 = vmatpush1.msra.mxu0 0.0
    %123 = vmatprep.subr.mxu0 0.0
    %124 = vmatpush1.msra.mxu0 0.0
    %125 = vmatprep.subr.mxu0 0.0
    %126 = vmatpush1.msra.mxu0 0.0
    %127 = vmatprep.subr.mxu0 0.0
    %128 = vmatpush1.msra.mxu0 0.0
    %129 = vmatprep.subr.mxu0 0.0
    %130 = vmatpush1.msra.mxu0 0.0
    %131 = vmatprep.subr.mxu0 0.0
    %132 = vmatpush1.msra.mxu0 0.0
    %133 = vmatprep.subr.mxu0 0.0
    %134 = vmatpush1.msra.mxu0 0.0
    %135 = vmatprep.subr.mxu0 0.0
    %136 = vmatpush1.msra.mxu0 0.0
    %137 = vmatprep.subr.mxu0 0.0
    %138 = vmatpush1.msra.mxu0 0.0
    %139 = vmatprep.subr.mxu0 0.0
    %140 = vmatpush1.msra.mxu0 0.0
    %141 = vmatprep.subr.mxu0 0.0
    %142 = vmatpush1.msra.mxu0 0.0
    %143 = vmatprep.subr.mxu0 0.0
    %144 = vmatpush1.msra.mxu0 0.0
    %145 = vmatprep.subr.mxu0 0.0
    %146 = vmatpush1.msra.mxu0 0.0
    %147 = vmatprep.subr.mxu0 0.0
    %148 = vmatpush1.msra.mxu0 0.0
    %149 = vmatprep.subr.mxu0 0.0
    %150 = vmatpush1.msra.mxu0 0.0
    %151 = vmatprep.mubr.f32.mxu0 0.0
    %152 = vmatmul.mubr.f32.gmra.mrb[0].mxu0 %v54
    %v153 = vpop.f32.mrb[0].mxu0
    %v154 = vadd.f32 0.0, %v153
    %v155 = vpop.f32.mrb[0].mxu0
    %v156 = vadd.f32 0.0, %v155
    %157 = vdwg.mxu0
    %v158 = vmax.f32 %v154, 0.0
    %v159 = vmax.f32 %v156, 0.0
    %v160 = vld [vmem:[#allocation7] sm:$0xff]
    %v161 = vld [vmem:[#allocation7 + $0x8] sm:$0xff]
    %v162 = vld [vmem:[#allocation7 + $0x10] sm:$0xff]
    %v163 = vld [vmem:[#allocation7 + $0x18] sm:$0xff]
    %v164 = vld [vmem:[#allocation7 + $0x20] sm:$0xff]
    %v165 = vld [vmem:[#allocation7 + $0x28] sm:$0xff]
    %v166 = vld [vmem:[#allocation7 + $0x30] sm:$0xff]
    %v167 = vld [vmem:[#allocation7 + $0x38] sm:$0xff]
    %v168 = vld [vmem:[#allocation7 + $0x40] sm:$0xff]
    %v169 = vld [vmem:[#allocation7 + $0x48] sm:$0xff]
    %v170 = vld [vmem:[#allocation7 + $0x50] sm:$0xff]
    %v171 = vld [vmem:[#allocation7 + $0x58] sm:$0xff]
    %v172 = vld [vmem:[#allocation7 + $0x60] sm:$0xff]
    %v173 = vld [vmem:[#allocation7 + $0x68] sm:$0xff]
    %v174 = vld [vmem:[#allocation7 + $0x70] sm:$0xff]
    %v175 = vld [vmem:[#allocation7 + $0x78] sm:$0xff]
    %v176 = vld [vmem:[#allocation7 + $0x80] sm:$0xff]
    %v177 = vld [vmem:[#allocation7 + $0x88] sm:$0xff]
    %v178 = vld [vmem:[#allocation7 + $0x90] sm:$0xff]
    %v179 = vld [vmem:[#allocation7 + $0x98] sm:$0xff]
    %v180 = vld [vmem:[#allocation7 + $0xa0] sm:$0xff]
    %v181 = vld [vmem:[#allocation7 + $0xa8] sm:$0xff]
    %v182 = vld [vmem:[#allocation7 + $0xb0] sm:$0xff]
    %v183 = vld [vmem:[#allocation7 + $0xb8] sm:$0xff]
    %v184 = vld [vmem:[#allocation7 + $0xc0] sm:$0xff]
    %v185 = vld [vmem:[#allocation7 + $0xc8] sm:$0xff]
    %v186 = vld [vmem:[#allocation7 + $0xd0] sm:$0xff]
    %v187 = vld [vmem:[#allocation7 + $0xd8] sm:$0xff]
    %v188 = vld [vmem:[#allocation7 + $0xe0] sm:$0xff]
    %v189 = vld [vmem:[#allocation7 + $0xe8] sm:$0xff]
    %v190 = vld [vmem:[#allocation7 + $0xf0] sm:$0xff]
    %v191 = vld [vmem:[#allocation7 + $0xf8] sm:$0xff]
    %v192 = vld [vmem:[#allocation7 + $0x100] sm:$0xff]
    %v193 = vld [vmem:[#allocation7 + $0x108] sm:$0xff]
    %v194 = vld [vmem:[#allocation7 + $0x110] sm:$0xff]
    %v195 = vld [vmem:[#allocation7 + $0x118] sm:$0xff]
    %v196 = vld [vmem:[#allocation7 + $0x120] sm:$0xff]
    %v197 = vld [vmem:[#allocation7 + $0x128] sm:$0xff]
    %v198 = vld [vmem:[#allocation7 + $0x130] sm:$0xff]
    %v199 = vld [vmem:[#allocation7 + $0x138] sm:$0xff]
    %v200 = vld [vmem:[#allocation7 + $0x140] sm:$0xff]
    %v201 = vld [vmem:[#allocation7 + $0x148] sm:$0xff]
    %v202 = vld [vmem:[#allocation7 + $0x150] sm:$0xff]
    %v203 = vld [vmem:[#allocation7 + $0x158] sm:$0xff]
    %v204 = vld [vmem:[#allocation7 + $0x160] sm:$0xff]
    %v205 = vld [vmem:[#allocation7 + $0x168] sm:$0xff]
    %v206 = vld [vmem:[#allocation7 + $0x170] sm:$0xff]
    %v207 = vld [vmem:[#allocation7 + $0x178] sm:$0xff]
    %v208 = vld [vmem:[#allocation7 + $0x180] sm:$0xff]
    %v209 = vld [vmem:[#allocation7 + $0x188] sm:$0xff]
    %v210 = vld [vmem:[#allocation7 + $0x190] sm:$0xff]
    %v211 = vld [vmem:[#allocation7 + $0x198] sm:$0xff]
    %v212 = vld [vmem:[#allocation7 + $0x1a0] sm:$0xff]
    %v213 = vld [vmem:[#allocation7 + $0x1a8] sm:$0xff]
    %v214 = vld [vmem:[#allocation7 + $0x1b0] sm:$0xff]
    %v215 = vld [vmem:[#allocation7 + $0x1b8] sm:$0xff]
    %v216 = vld [vmem:[#allocation7 + $0x1c0] sm:$0xff]
    %v217 = vld [vmem:[#allocation7 + $0x1c8] sm:$0xff]
    %v218 = vld [vmem:[#allocation7 + $0x1d0] sm:$0xff]
    %v219 = vld [vmem:[#allocation7 + $0x1d8] sm:$0xff]
    %v220 = vld [vmem:[#allocation7 + $0x1e0] sm:$0xff]
    %v221 = vld [vmem:[#allocation7 + $0x1e8] sm:$0xff]
    %v222 = vld [vmem:[#allocation7 + $0x1f0] sm:$0xff]
    %v223 = vld [vmem:[#allocation7 + $0x1f8] sm:$0xff]
    %224 = vmatprep.subr.mxu0 %v161
    %225 = vmatpush1.msra.mxu0 %v160
    %226 = vmatprep.subr.mxu0 %v163
    %227 = vmatpush1.msra.mxu0 %v162
    %228 = vmatprep.subr.mxu0 %v165
    %229 = vmatpush1.msra.mxu0 %v164
    %230 = vmatprep.subr.mxu0 %v167
    %231 = vmatpush1.msra.mxu0 %v166
    %232 = vmatprep.subr.mxu0 %v169
    %233 = vmatpush1.msra.mxu0 %v168
    %234 = vmatprep.subr.mxu0 %v171
    %235 = vmatpush1.msra.mxu0 %v170
    %236 = vmatprep.subr.mxu0 %v173
    %237 = vmatpush1.msra.mxu0 %v172
    %238 = vmatprep.subr.mxu0 %v175
    %239 = vmatpush1.msra.mxu0 %v174
    %240 = vmatprep.subr.mxu0 %v177
    %241 = vmatpush1.msra.mxu0 %v176
    %242 = vmatprep.subr.mxu0 %v179
    %243 = vmatpush1.msra.mxu0 %v178
    %244 = vmatprep.subr.mxu0 %v181
    %245 = vmatpush1.msra.mxu0 %v180
    %246 = vmatprep.subr.mxu0 %v183
    %247 = vmatpush1.msra.mxu0 %v182
    %248 = vmatprep.subr.mxu0 %v185
    %249 = vmatpush1.msra.mxu0 %v184
    %250 = vmatprep.subr.mxu0 %v187
    %251 = vmatpush1.msra.mxu0 %v186
    %252 = vmatprep.subr.mxu0 %v189
    %253 = vmatpush1.msra.mxu0 %v188
    %254 = vmatprep.subr.mxu0 %v191
    %255 = vmatpush1.msra.mxu0 %v190
    %256 = vmatprep.subr.mxu0 %v193
    %257 = vmatpush1.msra.mxu0 %v192
    %258 = vmatprep.subr.mxu0 %v195
    %259 = vmatpush1.msra.mxu0 %v194
    %260 = vmatprep.subr.mxu0 %v197
    %261 = vmatpush1.msra.mxu0 %v196
    %262 = vmatprep.subr.mxu0 %v199
    %263 = vmatpush1.msra.mxu0 %v198
    %264 = vmatprep.subr.mxu0 %v201
    %265 = vmatpush1.msra.mxu0 %v200
    %266 = vmatprep.subr.mxu0 %v203
    %267 = vmatpush1.msra.mxu0 %v202
    %268 = vmatprep.subr.mxu0 %v205
    %269 = vmatpush1.msra.mxu0 %v204
    %270 = vmatprep.subr.mxu0 %v207
    %271 = vmatpush1.msra.mxu0 %v206
    %272 = vmatprep.subr.mxu0 %v209
    %273 = vmatpush1.msra.mxu0 %v208
    %274 = vmatprep.subr.mxu0 %v211
    %275 = vmatpush1.msra.mxu0 %v210
    %276 = vmatprep.subr.mxu0 %v213
    %277 = vmatpush1.msra.mxu0 %v212
    %278 = vmatprep.subr.mxu0 %v215
    %279 = vmatpush1.msra.mxu0 %v214
    %280 = vmatprep.subr.mxu0 %v217
    %281 = vmatpush1.msra.mxu0 %v216
    %282 = vmatprep.subr.mxu0 %v219
    %283 = vmatpush1.msra.mxu0 %v218
    %284 = vmatprep.subr.mxu0 %v221
    %285 = vmatpush1.msra.mxu0 %v220
    %286 = vmatprep.subr.mxu0 %v223
    %287 = vmatpush1.msra.mxu0 %v222
    %288 = vmatprep.mubr.f32.mxu0 %v159
    %289 = vmatmul.mubr.f32.gmra.mrb[0].mxu0 %v158
    %v290 = vpop.f32.mrb[0].mxu0
    %v291 = vadd.f32 0.0, %v290
    %v292 = vpop.f32.mrb[0].mxu0
    %v293 = vadd.f32 0.0, %v292
    %294 = vdwg.mxu0
    %295 = vst [vmem:[#allocation8] sm:$0xff] %v291
    %296 = vst [vmem:[#allocation8 + $0x8] sm:$0xff] %v293
    // Predicated region
    $region26: #{tpu_custom_call.1} parent=1 // pred_check
      _
    $region27: #{tpu_custom_call.1} parent=1 // pred_check_branch
      %298 = sbr.rel (0) target = $region29
    $region28: #{tpu_custom_call.1} parent=1 // pred_region
      %s300 = ssub.s32 256, 256
      %301 = vsyncadd [#allocation4], %s300
      %s303 = sshll.u32 [#allocation8], 4
      %s304 = int_to_ptr.vmem [resolvable:$true] %s303
      %306 = dma.vmem_to_hbm [thread:$0]  %s304, 256, %s3, [#allocation4]
    $region29: #{tpu_custom_call.1} parent=1 // pred_fallthru
      _
    // Predicated region
    $region30: #{tpu_custom_call.1} parent=1 // pred_check
      _
    $region31: #{tpu_custom_call.1} parent=1 // pred_check_branch
      %308 = sbr.rel (0) target = $region33
    $region32: #{tpu_custom_call.1} parent=1 // pred_region
      %309 = dma.done [#allocation4], 256
    $region33: #{tpu_custom_call.1} parent=1 // pred_fallthru
      _
    %310 = vsyncpa [#allocation3], 1
    %311 = vsyncpa [#allocation6], 1
    %312 = vsyncpa [#allocation4], 1

</llo_original>
